<compile_context>
chip_gen: v7x
topology: tpu7x:2x2x1
jax: 0.10.0
libtpu: 0.0.40
codegen_flags: <defaults>
</compile_context>

<pallas_src>
import jax
import jax.numpy as jnp
from jax.experimental import pallas as pl
from jax.experimental.pallas import tpu as pltpu


def _linear_kernel(w_ref, b_ref, x_ref, o_ref):
    # w_ref: (3,) f32 in SMEM, b_ref: (1,) f32 in SMEM
    # x_ref: (3, TILE) f32 in VMEM (batch on lanes), o_ref: (1, TILE) f32
    w0 = w_ref[0]
    w1 = w_ref[1]
    w2 = w_ref[2]
    b = b_ref[0]
    x = x_ref[...]                                    # (3, TILE)
    # y = w0*x0 + w1*x1 + w2*x2 + b  — pure VPU work, lane-dense store.
    y = w0 * x[0:1, :] + w1 * x[1:2, :] + w2 * x[2:3, :] + b
    o_ref[...] = y.astype(o_ref.dtype)


def poly_model_forward(x, weight, bias, *, tile=65536):
    """Pallas equivalent of PolyModel.forward: nn.Linear(3, 1).

    x:      (N, 3) float32
    weight: (1, 3) float32   (PyTorch nn.Linear layout)
    bias:   (1,)   float32
    returns (N, 1) float32
    """
    n = x.shape[0]

    # Tile on the lane (batch) axis: multiple of 128, but no bigger than the
    # padded batch (avoids huge zero-padding for tiny N). Powers of two >= 128
    # are always 128-aligned.
    tile = int(max(128, min(tile, pl.next_power_of_2(max(n, 1)))))
    n_pad = pl.cdiv(n, tile) * tile

    # Lane-dense layout: features on sublanes, batch on lanes.
    xt = x.T                                           # (3, N)
    if n_pad != n:
        xt = jnp.pad(xt, ((0, 0), (0, n_pad - n)))     # zero-pad ragged tail

    w_flat = weight.reshape(3).astype(jnp.float32)     # SMEM scalars
    b_flat = bias.reshape(1).astype(jnp.float32)

    out_t = pl.pallas_call(
        _linear_kernel,
        out_shape=jax.ShapeDtypeStruct((1, n_pad), jnp.float32),
        grid=(n_pad // tile,),
        in_specs=[
            pl.BlockSpec(memory_space=pltpu.SMEM),     # weight (3,)  — scalars
            pl.BlockSpec(memory_space=pltpu.SMEM),     # bias   (1,)  — scalar
            pl.BlockSpec((3, tile), lambda i: (0, i)),  # x tile (3, TILE)
        ],
        out_specs=pl.BlockSpec((1, tile), lambda i: (0, i)),
        compiler_params=pltpu.CompilerParams(
            dimension_semantics=("parallel",),
        ),
    )(w_flat, b_flat, xt)

    # Drop padding, return in the PyTorch (N, 1) convention.
    return out_t[:, :n].T


if __name__ == "__main__":
    key = jax.random.PRNGKey(0)
    kx, kw, kb, kx2 = jax.random.split(key, 4)

    # Deterministic parameter init (same shapes as nn.Linear(3, 1)):
    # PyTorch uses U(-1/sqrt(in_features), 1/sqrt(in_features)).
    bound = 1.0 / jnp.sqrt(3.0)
    weight = jax.random.uniform(kw, (1, 3), jnp.float32, -bound, bound)
    bias = jax.random.uniform(kb, (1,), jnp.float32, -bound, bound)

    # Small batch (single tile).
    batch = 8
    x = jax.random.normal(kx, (batch, 3), jnp.float32)
    out = jax.block_until_ready(poly_model_forward(x, weight, bias))
    ref = x @ weight.T + bias[None, :]
    assert out.shape == (batch, 1)
    assert jnp.allclose(out, ref, atol=1e-5, rtol=1e-5)

    # Ragged batch (exercises padding + multi-tile path with a small tile).
    batch2 = 300
    x2 = jax.random.normal(kx2, (batch2, 3), jnp.float32)
    out2 = jax.block_until_ready(poly_model_forward(x2, weight, bias, tile=128))
    ref2 = x2 @ weight.T + bias[None, :]
    assert out2.shape == (batch2, 1)
    assert jnp.allclose(out2, ref2, atol=1e-5, rtol=1e-5)

    print("KERNEL_OK")
</pallas_src>

<mosaic_0001>
module attributes {stable_mosaic.version = 11 : i64} {
  func.func @_linear_kernel(%arg0: i32, %arg1: memref<3xf32, #tpu.memory_space<smem>>, %arg2: memref<1xf32, #tpu.memory_space<smem>>, %arg3: memref<3x128xf32, #tpu.memory_space<vmem>>, %arg4: memref<1x128xf32, #tpu.memory_space<vmem>>) attributes {dimension_semantics = [#tpu.dimension_semantics<parallel>], iteration_bounds = array<i64: 1>, scalar_prefetch = 0 : i64, scratch_operands = 0 : i64, tpu.core_type = #tpu.core_type<tc>, window_params = [{transform_indices = @transform_0, window_bounds = array<i64: 3>}, {transform_indices = @transform_1, window_bounds = array<i64: 1>}, {transform_indices = @transform_2, window_bounds = array<i64: 3, 128>}, {transform_indices = @transform_3, window_bounds = array<i64: 1, 128>}]} {
    %c0 = arith.constant 0 : index
    %0 = memref.load %arg1[%c0] : memref<3xf32, #tpu.memory_space<smem>>
    %c1 = arith.constant 1 : index
    %1 = memref.load %arg1[%c1] : memref<3xf32, #tpu.memory_space<smem>>
    %c2 = arith.constant 2 : index
    %2 = memref.load %arg1[%c2] : memref<3xf32, #tpu.memory_space<smem>>
    %c0_0 = arith.constant 0 : index
    %3 = memref.load %arg2[%c0_0] : memref<1xf32, #tpu.memory_space<smem>>
    %c0_1 = arith.constant 0 : index
    %c0_2 = arith.constant 0 : index
    %4 = vector.load %arg3[%c0_1, %c0_2] : memref<3x128xf32, #tpu.memory_space<vmem>>, vector<3x128xf32>
    %5 = vector.extract_strided_slice %4 {offsets = [0, 0], sizes = [1, 128], strides = [1, 1]} : vector<3x128xf32> to vector<1x128xf32>
    %6 = vector.broadcast %0 : f32 to vector<1x128xf32>
    %7 = arith.mulf %6, %5 : vector<1x128xf32>
    %8 = vector.extract_strided_slice %4 {offsets = [1, 0], sizes = [1, 128], strides = [1, 1]} : vector<3x128xf32> to vector<1x128xf32>
    %9 = vector.broadcast %1 : f32 to vector<1x128xf32>
    %10 = arith.mulf %9, %8 : vector<1x128xf32>
    %11 = arith.addf %7, %10 : vector<1x128xf32>
    %12 = vector.extract_strided_slice %4 {offsets = [2, 0], sizes = [1, 128], strides = [1, 1]} : vector<3x128xf32> to vector<1x128xf32>
    %13 = vector.broadcast %2 : f32 to vector<1x128xf32>
    %14 = arith.mulf %13, %12 : vector<1x128xf32>
    %15 = arith.addf %11, %14 : vector<1x128xf32>
    %16 = vector.broadcast %3 : f32 to vector<1x128xf32>
    %17 = arith.addf %15, %16 : vector<1x128xf32>
    %c0_3 = arith.constant 0 : index
    %c0_4 = arith.constant 0 : index
    %18 = vector.load %arg4[%c0_3, %c0_4] : memref<1x128xf32, #tpu.memory_space<vmem>>, vector<1x128xf32>
    tpu.vector_store %arg4[%c0_3, %c0_4], %17 {strides = array<i32>} : memref<1x128xf32, #tpu.memory_space<vmem>>, vector<1x128xf32>,
    return
  }
  func.func @transform_0(%arg0: i32) -> i32 {
    %c0_i32 = arith.constant 0 : i32
    %c0_i32_0 = arith.constant 0 : i32
    return %c0_i32 : i32
  }
  func.func @transform_1(%arg0: i32) -> i32 {
    %c0_i32 = arith.constant 0 : i32
    %c0_i32_0 = arith.constant 0 : i32
    return %c0_i32 : i32
  }
  func.func @transform_2(%arg0: i32) -> (i32, i32) {
    %c0_i32 = arith.constant 0 : i32
    %c0_i32_0 = arith.constant 0 : i32
    return %c0_i32, %arg0 : i32, i32
  }
  func.func @transform_3(%arg0: i32) -> (i32, i32) {
    %c0_i32 = arith.constant 0 : i32
    %c0_i32_0 = arith.constant 0 : i32
    return %c0_i32, %arg0 : i32, i32
  }
}

</mosaic_0001>

<llo_original>
// kernel: tpu_custom_call.1
$region0: #{tpu_custom_call.1}
  #allocation0 [shape = 'u32[]', space=smem, size = 0x4, offset = 0x4, fixed_abs, tag = 'smem constant byte address 0x4 - core index']
  #allocation1 [shape = 'u32[144,128]{1,0:T(1,128)}', space=vmem, size = 0x12000, scoped, tag = 'internal scratch']
  #allocation2 [shape = 'f32[1]{0:T(128)S(6)}', space=smem, size = 0x200, scoped, tag = 'scoped memory for tpu_custom_call.1']
  %s0 = inlined_call_operand.vmem [shape: f32[3], index: 0, kind: input, shape index: {}]
  %s1 = inlined_call_operand.<no memory space> [shape: f32[1], index: 1, kind: input, shape index: {}]
  %s2 = inlined_call_operand.vmem [shape: f32[3,128], index: 2, kind: input, shape index: {}]
  %s3 = inlined_call_operand.hbm [shape: f32[1,128], index: 3, kind: output, shape index: {}]
  %s4 = sld [smem:[#allocation0]]
  $region26: #{tpu_custom_call.1} parent=0
    _
  %s6 = ssub.s32 1, %s4
  %s7 = scalar_select 0, %s6, %s4
  %8 = sst [smem:[#allocation2]] %s1
  $region1: #{tpu_custom_call.1} parent=0
    #allocation3 [shape = 'u8[512]{0}', space=smem, size = 0x200, scoped, tag = 'input window, operand 0, single buffered']
    #allocation4 [shape = 's32[1]{0}', space=sflag, size = 0x4, scoped, tag = 'scoped memory for tpu_custom_call.1']
    #allocation5 [shape = 's32[1]{0}', space=sflag, size = 0x4, scoped, tag = 'scoped memory for tpu_custom_call.1']
    #allocation6 [shape = 'u8[512]{0}', space=vmem, size = 0x400, scoped, tag = 'output window, operand 0, single buffered']
    %9 = vsyncpa [#allocation5], 0
    %10 = vsyncpa [#allocation4], 0
    // Predicated region
    $region2: #{tpu_custom_call.1} parent=1 // pred_check
      _
    $region3: #{tpu_custom_call.1} parent=1 // pred_check_branch
      %12 = sbr.rel (0) target = $region5
    $region4: #{tpu_custom_call.1} parent=1 // pred_region
      %s14 = ssub.s32 16, 16
      %15 = vsyncadd [#allocation5], %s14
      %s17 = sshll.u32 %s0, 4
      %s18 = int_to_ptr.vmem [resolvable:$true] %s17
      %20 = dma.vmem_to_smem %s18, 16, [#allocation3], [#allocation5]
    $region5: #{tpu_custom_call.1} parent=1 // pred_fallthru
      _
    // Predicated region
    $region6: #{tpu_custom_call.1} parent=1 // pred_check
      _
    $region7: #{tpu_custom_call.1} parent=1 // pred_check_branch
      %22 = sbr.rel (0) target = $region9
    $region8: #{tpu_custom_call.1} parent=1 // pred_region
      _
    $region9: #{tpu_custom_call.1} parent=1 // pred_fallthru
      _
    // Predicated region
    $region10: #{tpu_custom_call.1} parent=1 // pred_check
      _
    $region11: #{tpu_custom_call.1} parent=1 // pred_check_branch
      %24 = sbr.rel (0) target = $region13
    $region12: #{tpu_custom_call.1} parent=1 // pred_region
      _
    $region13: #{tpu_custom_call.1} parent=1 // pred_fallthru
      _
    // Predicated region
    $region14: #{tpu_custom_call.1} parent=1 // pred_check
      _
    $region15: #{tpu_custom_call.1} parent=1 // pred_check_branch
      %26 = sbr.rel (0) target = $region17
    $region16: #{tpu_custom_call.1} parent=1 // pred_region
      %27 = dma.done [#allocation5], 16
    $region17: #{tpu_custom_call.1} parent=1 // pred_fallthru
      _
    %28 = sfence
    %s29 = sld [smem:[#allocation3]]
    %s30 = sld [smem:[#allocation3 + $0x1]]
    %s31 = sld [smem:[#allocation3 + $0x2]]
    %s32 = sld [smem:[#allocation2]]
    %v33 = vld [vmem:[%s2] sm:$0x7]
    %v34 = vstv %s29
    %v35 = vmul.f32 %v34, %v33
    %v36 = vstv %s30
    %v37 = vmul.f32 %v36, %v33
    %v39 = vrot.slane %v37, 1
    %v41 = vadd.f32 %v35, %v39
    %v42 = vstv %s31
    %v43 = vmul.f32 %v42, %v33
    %v45 = vrot.slane %v43, 2
    %v47 = vadd.f32 %v41, %v45
    %v48 = vstv %s32
    %v49 = vadd.f32 %v47, %v48
    %50 = vst [vmem:[#allocation6] sm:$0x1] %v49
    // Predicated region
    $region18: #{tpu_custom_call.1} parent=1 // pred_check
      _
    $region19: #{tpu_custom_call.1} parent=1 // pred_check_branch
      %52 = sbr.rel (0) target = $region21
    $region20: #{tpu_custom_call.1} parent=1 // pred_region
      %s54 = ssub.s32 16, 16
      %55 = vsyncadd [#allocation4], %s54
      %s57 = sshll.u32 [#allocation6], 4
      %s58 = int_to_ptr.vmem [resolvable:$true] %s57
      %60 = dma.vmem_to_hbm [thread:$0]  %s58, 16, %s3, [#allocation4]
    $region21: #{tpu_custom_call.1} parent=1 // pred_fallthru
      _
    // Predicated region
    $region22: #{tpu_custom_call.1} parent=1 // pred_check
      _
    $region23: #{tpu_custom_call.1} parent=1 // pred_check_branch
      %62 = sbr.rel (0) target = $region25
    $region24: #{tpu_custom_call.1} parent=1 // pred_region
      %63 = dma.done [#allocation4], 16
    $region25: #{tpu_custom_call.1} parent=1 // pred_fallthru
      _
    %64 = vsyncpa [#allocation4], 1
    %65 = vsyncpa [#allocation5], 1

</llo_original>
